<compile_context>
chip_gen: v7x
topology: tpu7x:2x2x1
jax: 0.10.0
libtpu: 0.0.40
codegen_flags: <defaults>
</compile_context>

<pallas_src>
import functools

import jax
import jax.numpy as jnp
from jax.experimental import pallas as pl
from jax.experimental.pallas import tpu as pltpu

_NUM_CORE_SPLITS = 2  # leading "parallel" grid axis (engages both TCs on v7x)


def _round_up(x, m):
    return ((x + m - 1) // m) * m


def _weighted_loss_kernel(meta_ref, logits_ref, out_ref, acc_ref, *,
                          pad_token_id, scaled_pairs, total_n, tile_n,
                          tiles_per_core):
    c = pl.program_id(0)      # core-split index (parallel)
    i = pl.program_id(1)      # row-tile index within this core's range (arbitrary)

    @pl.when(i == 0)
    def _():
        acc_ref[...] = jnp.zeros_like(acc_ref)

    logits = logits_ref[...].astype(jnp.float32)     # (TN, V) f32 (cast in-kernel)
    meta = meta_ref[...]                             # (TN, 2) i32
    labels = meta[:, 0:1]                            # (TN, 1)
    ids = meta[:, 1:2]                               # (TN, 1)

    # --- cross entropy: log-softmax + label gather (no materialized one-hot) ---
    m = jnp.max(logits, axis=-1, keepdims=True)                          # (TN, 1)
    lse = m + jnp.log(jnp.sum(jnp.exp(logits - m), axis=-1, keepdims=True))
    col = jax.lax.broadcasted_iota(jnp.int32, logits.shape, 1)           # (TN, V)
    gathered = jnp.sum(jnp.where(col == labels, logits, 0.0),
                       axis=-1, keepdims=True)                           # (TN, 1)
    base = jnp.where(labels != pad_token_id, lse - gathered, 0.0)

    # --- anchor mask, with self.weight folded into each anchor weight ---
    anchor = jnp.zeros_like(base)
    for tok_id, w in scaled_pairs:
        anchor = anchor + jnp.float32(w) * (ids == tok_id).astype(jnp.float32)

    weighted = base + anchor                                             # (TN, 1)

    # --- mask out rows that are padding (beyond the real N) ---
    row0 = (c * tiles_per_core + i) * tile_n
    rows = row0 + jax.lax.broadcasted_iota(jnp.int32, (tile_n, 1), 0)
    weighted = jnp.where(rows < total_n, weighted, 0.0)

    acc_ref[...] += weighted                         # vector accumulate in VMEM

    @pl.when(i == tiles_per_core - 1)
    def _():
        partial = jnp.sum(acc_ref[...])              # single final XLU reduce
        out_ref[...] = jnp.full(out_ref.shape, partial, dtype=out_ref.dtype)


def weighted_loss_rl(labels, logits, input_ids, *, pad_token_id, anchor_pairs,
                     weight=2.0, tile_n=None):
    """labels: (B,S) int, logits: (B,S,V) f32/bf16, input_ids: (B,S) int -> scalar f32."""
    B, S, V = logits.shape
    N = B * S
    elem = jnp.dtype(logits.dtype).itemsize
    # sublane packing granularity for the logits dtype
    mult = {4: 8, 2: 16, 1: 32}.get(elem, 8)

    if tile_n is None:
        # keep the double-buffered logits tile under ~16 MiB (fits every gen,
        # incl. v7x's 64 MiB VMEM, with headroom under a 32 MiB scoped limit)
        budget = 16 * 1024 * 1024
        cap = max(mult, min(1024, (budget // (2 * V * elem)) // mult * mult))
        half = (N + _NUM_CORE_SPLITS - 1) // _NUM_CORE_SPLITS
        tile_n = min(cap, _round_up(half, mult))
    tile_n = _round_up(tile_n, mult)

    half = (N + _NUM_CORE_SPLITS - 1) // _NUM_CORE_SPLITS
    tiles_per_core = max(1, (half + tile_n - 1) // tile_n)
    padded_n = _NUM_CORE_SPLITS * tiles_per_core * tile_n

    # Stream logits in their native dtype (no wrapper upcast); pack labels+ids.
    logits2 = logits.reshape(N, V)
    meta = jnp.stack([labels.reshape(N).astype(jnp.int32),
                      input_ids.reshape(N).astype(jnp.int32)], axis=-1)  # (N, 2)
    pad_rows = padded_n - N
    if pad_rows:
        logits2 = jnp.concatenate(
            [logits2, jnp.zeros((pad_rows, V), logits2.dtype)], axis=0)
        meta = jnp.concatenate(
            [meta, jnp.zeros((pad_rows, 2), jnp.int32)], axis=0)

    scaled_pairs = tuple((int(t), float(weight) * float(w))
                         for t, w in anchor_pairs)

    kernel = functools.partial(
        _weighted_loss_kernel,
        pad_token_id=int(pad_token_id),
        scaled_pairs=scaled_pairs,
        total_n=int(N),
        tile_n=int(tile_n),
        tiles_per_core=int(tiles_per_core),
    )

    cost = pl.CostEstimate(
        flops=8 * padded_n * V,
        transcendentals=padded_n * V,
        bytes_accessed=padded_n * V * elem + padded_n * 2 * 4 + 16 * 128 * 4,
    )

    # Output: one (8,128) f32 block per core-split; partial sum broadcast into
    # the block, wrapper reads element [c*8, 0] of each and combines.
    partials = pl.pallas_call(
        kernel,
        out_shape=jax.ShapeDtypeStruct((_NUM_CORE_SPLITS * 8, 128), jnp.float32),
        grid_spec=pltpu.PrefetchScalarGridSpec(
            num_scalar_prefetch=0,
            grid=(_NUM_CORE_SPLITS, tiles_per_core),
            in_specs=[
                pl.BlockSpec((tile_n, 2),
                             lambda c, i: (c * tiles_per_core + i, 0)),  # meta
                pl.BlockSpec((tile_n, V),
                             lambda c, i: (c * tiles_per_core + i, 0)),  # logits
            ],
            out_specs=pl.BlockSpec((8, 128), lambda c, i: (c, 0)),
            scratch_shapes=[pltpu.VMEM((tile_n, 1), jnp.float32)],
        ),
        compiler_params=pltpu.CompilerParams(
            dimension_semantics=("parallel", "arbitrary"),
            vmem_limit_bytes=32 * 1024 * 1024,
        ),
        cost_estimate=cost,
    )(meta, logits2)

    total = partials[0, 0]
    for c in range(1, _NUM_CORE_SPLITS):
        total = total + partials[c * 8, 0]
    # NOTE: matches reference semantics — mean over ALL B*S positions
    # (pad rows contribute 0 loss but still count in the denominator).
    return total / jnp.float32(N)


def _reference(labels, logits, input_ids, *, pad_token_id, anchor_pairs, weight):
    B, S, V = logits.shape
    lg = logits.reshape(-1, V).astype(jnp.float32)
    lb = labels.reshape(-1)
    lse = jax.nn.logsumexp(lg, axis=-1)
    gathered = jnp.take_along_axis(lg, lb[:, None], axis=-1)[:, 0]
    base = jnp.where(lb != pad_token_id, lse - gathered, 0.0)
    anchor = jnp.zeros_like(base)
    ids = input_ids.reshape(-1)
    for tok_id, w in anchor_pairs:
        anchor = anchor + w * (ids == tok_id).astype(jnp.float32)
    return jnp.mean(base + weight * anchor)


if __name__ == "__main__":
    key = jax.random.PRNGKey(0)
    B, S, V = 2, 8, 128            # small shapes: batch=2, seq=8, vocab=128
    pad_token_id = 0
    # synthetic "tokenizer": anchor tokens map to ids 120, 121, 122 with weight 1.0 each
    anchor_pairs = ((120, 1.0), (121, 1.0), (122, 1.0))
    loss_weight = 2.0

    k1, k2, k3 = jax.random.split(key, 3)
    # logits kept in bf16 — the kernel streams bf16 and casts to f32 in-VMEM
    logits = jax.random.normal(k1, (B, S, V), dtype=jnp.float32).astype(jnp.bfloat16)
    labels = jax.random.randint(k2, (B, S), 0, V, dtype=jnp.int32)
    input_ids = jax.random.randint(k3, (B, S), 0, V, dtype=jnp.int32)
    # force some pad labels and some anchor-token occurrences
    labels = labels.at[0, 0].set(pad_token_id).at[1, 3].set(pad_token_id)
    input_ids = input_ids.at[0, 2].set(120).at[1, 5].set(122)

    loss = weighted_loss_rl(labels, logits, input_ids,
                            pad_token_id=pad_token_id,
                            anchor_pairs=anchor_pairs,
                            weight=loss_weight)
    loss = jax.block_until_ready(loss)

    ref = _reference(labels, logits, input_ids,
                     pad_token_id=pad_token_id,
                     anchor_pairs=anchor_pairs,
                     weight=loss_weight)
    # TODO(synk): labels outside [0, V) other than pad_token_id (e.g. -100) are not
    # specially handled; they gather 0 like in v1 — confirm intended convention.
    assert jnp.allclose(loss, ref, rtol=2e-5, atol=2e-5), (loss, ref)
    print("KERNEL_OK")
</pallas_src>

<mosaic_0001>
module attributes {stable_mosaic.version = 11 : i64} {
  func.func @_weighted_loss_kernel(%arg0: i32, %arg1: i32, %arg2: memref<16x2xi32, #tpu.memory_space<vmem>>, %arg3: memref<16x128xbf16, #tpu.memory_space<vmem>>, %arg4: memref<8x128xf32, #tpu.memory_space<vmem>>, %arg5: memref<16x1xf32, #tpu.memory_space<vmem>>) attributes {dimension_semantics = [#tpu.dimension_semantics<parallel>, #tpu.dimension_semantics<arbitrary>], iteration_bounds = array<i64: 2, 1>, scalar_prefetch = 0 : i64, scratch_operands = 1 : i64, tpu.core_type = #tpu.core_type<tc>, window_params = [{transform_indices = @transform_0, window_bounds = array<i64: 16, 2>}, {transform_indices = @transform_1, window_bounds = array<i64: 16, 128>}, {transform_indices = @transform_2, window_bounds = array<i64: 8, 128>}]} {
    %c0_i32 = arith.constant 0 : i32
    %0 = arith.cmpi eq, %arg1, %c0_i32 : i32
    %1 = arith.extui %0 : i1 to i32
    %c0_i32_0 = arith.constant 0 : i32
    %2 = arith.cmpi ne, %1, %c0_i32_0 : i32
    scf.if %2 {
      %cst_21 = arith.constant 0.000000e+00 : f32
      %68 = vector.broadcast %cst_21 : f32 to vector<16x1xf32>
      %c0_22 = arith.constant 0 : index
      %c0_23 = arith.constant 0 : index
      %69 = vector.load %arg5[%c0_22, %c0_23] : memref<16x1xf32, #tpu.memory_space<vmem>>, vector<16x1xf32>
      tpu.vector_store %arg5[%c0_22, %c0_23], %68 {strides = array<i32>} : memref<16x1xf32, #tpu.memory_space<vmem>>, vector<16x1xf32>,
    } else {
    }
    %c0 = arith.constant 0 : index
    %c0_1 = arith.constant 0 : index
    %3 = vector.load %arg3[%c0, %c0_1] : memref<16x128xbf16, #tpu.memory_space<vmem>>, vector<16x128xbf16>
    %4 = arith.extf %3 : vector<16x128xbf16> to vector<16x128xf32>
    %c0_2 = arith.constant 0 : index
    %c0_3 = arith.constant 0 : index
    %5 = vector.load %arg2[%c0_2, %c0_3] : memref<16x2xi32, #tpu.memory_space<vmem>>, vector<16x2xi32>
    %6 = vector.extract_strided_slice %5 {offsets = [0, 0], sizes = [16, 1], strides = [1, 1]} : vector<16x2xi32> to vector<16x1xi32>
    %7 = vector.extract_strided_slice %5 {offsets = [0, 1], sizes = [16, 1], strides = [1, 1]} : vector<16x2xi32> to vector<16x1xi32>
    %cst = arith.constant dense<0xFF800000> : vector<16xf32>
    %8 = vector.multi_reduction <maximumf>, %4, %cst [1] : vector<16x128xf32> to vector<16xf32>
    %9 = vector.shape_cast %8 : vector<16xf32> to vector<16x1xf32>
    %10 = vector.broadcast %9 : vector<16x1xf32> to vector<16x128xf32>
    %11 = arith.subf %4, %10 : vector<16x128xf32>
    %12 = math.exp %11 : vector<16x128xf32>
    %cst_4 = arith.constant dense<0.000000e+00> : vector<16xf32>
    %13 = vector.multi_reduction <add>, %12, %cst_4 [1] : vector<16x128xf32> to vector<16xf32>
    %14 = vector.shape_cast %13 : vector<16xf32> to vector<16x1xf32>
    %15 = math.log %14 : vector<16x1xf32>
    %16 = arith.addf %9, %15 : vector<16x1xf32>
    %17 = tpu.iota {dimensions = array<i32: 1>} : vector<16x128xi32>
    %18 = vector.broadcast %6 : vector<16x1xi32> to vector<16x128xi32>
    %19 = arith.cmpi eq, %17, %18 : vector<16x128xi32>
    %cst_5 = arith.constant 0.000000e+00 : f32
    %20 = vector.broadcast %cst_5 : f32 to vector<16x128xf32>
    %21 = arith.select %19, %4, %20 : vector<16x128xi1>, vector<16x128xf32>
    %cst_6 = arith.constant dense<0.000000e+00> : vector<16xf32>
    %22 = vector.multi_reduction <add>, %21, %cst_6 [1] : vector<16x128xf32> to vector<16xf32>
    %23 = vector.shape_cast %22 : vector<16xf32> to vector<16x1xf32>
    %c0_i32_7 = arith.constant 0 : i32
    %24 = vector.broadcast %c0_i32_7 : i32 to vector<16x1xi32>
    %25 = arith.cmpi ne, %6, %24 : vector<16x1xi32>
    %26 = arith.subf %16, %23 : vector<16x1xf32>
    %cst_8 = arith.constant 0.000000e+00 : f32
    %27 = vector.broadcast %cst_8 : f32 to vector<16x1xf32>
    %28 = arith.select %25, %26, %27 : vector<16x1xi1>, vector<16x1xf32>
    %cst_9 = arith.constant 0.000000e+00 : f32
    %29 = vector.broadcast %cst_9 : f32 to vector<16x1xf32>
    %c120_i32 = arith.constant 120 : i32
    %30 = vector.broadcast %c120_i32 : i32 to vector<16x1xi32>
    %31 = arith.cmpi eq, %7, %30 : vector<16x1xi32>
    %32 = arith.extui %31 : vector<16x1xi1> to vector<16x1xi32>
    %33 = arith.sitofp %32 : vector<16x1xi32> to vector<16x1xf32>
    %cst_10 = arith.constant 2.000000e+00 : f32
    %34 = vector.broadcast %cst_10 : f32 to vector<16x1xf32>
    %35 = arith.mulf %34, %33 : vector<16x1xf32>
    %36 = arith.addf %29, %35 : vector<16x1xf32>
    %c121_i32 = arith.constant 121 : i32
    %37 = vector.broadcast %c121_i32 : i32 to vector<16x1xi32>
    %38 = arith.cmpi eq, %7, %37 : vector<16x1xi32>
    %39 = arith.extui %38 : vector<16x1xi1> to vector<16x1xi32>
    %40 = arith.sitofp %39 : vector<16x1xi32> to vector<16x1xf32>
    %cst_11 = arith.constant 2.000000e+00 : f32
    %41 = vector.broadcast %cst_11 : f32 to vector<16x1xf32>
    %42 = arith.mulf %41, %40 : vector<16x1xf32>
    %43 = arith.addf %36, %42 : vector<16x1xf32>
    %c122_i32 = arith.constant 122 : i32
    %44 = vector.broadcast %c122_i32 : i32 to vector<16x1xi32>
    %45 = arith.cmpi eq, %7, %44 : vector<16x1xi32>
    %46 = arith.extui %45 : vector<16x1xi1> to vector<16x1xi32>
    %47 = arith.sitofp %46 : vector<16x1xi32> to vector<16x1xf32>
    %cst_12 = arith.constant 2.000000e+00 : f32
    %48 = vector.broadcast %cst_12 : f32 to vector<16x1xf32>
    %49 = arith.mulf %48, %47 : vector<16x1xf32>
    %50 = arith.addf %43, %49 : vector<16x1xf32>
    %51 = arith.addf %28, %50 : vector<16x1xf32>
    %c1_i32 = arith.constant 1 : i32
    %52 = arith.muli %arg0, %c1_i32 : i32
    %53 = arith.addi %52, %arg1 : i32
    %c16_i32 = arith.constant 16 : i32
    %54 = arith.muli %53, %c16_i32 : i32
    %55 = tpu.iota {dimensions = array<i32: 0>} : vector<16x1xi32>
    %56 = vector.broadcast %54 : i32 to vector<16x1xi32>
    %57 = arith.addi %56, %55 : vector<16x1xi32>
    %c16_i32_13 = arith.constant 16 : i32
    %58 = vector.broadcast %c16_i32_13 : i32 to vector<16x1xi32>
    %59 = arith.cmpi slt, %57, %58 : vector<16x1xi32>
    %cst_14 = arith.constant 0.000000e+00 : f32
    %60 = vector.broadcast %cst_14 : f32 to vector<16x1xf32>
    %61 = arith.select %59, %51, %60 : vector<16x1xi1>, vector<16x1xf32>
    %c0_15 = arith.constant 0 : index
    %c0_16 = arith.constant 0 : index
    %62 = vector.load %arg5[%c0_15, %c0_16] : memref<16x1xf32, #tpu.memory_space<vmem>>, vector<16x1xf32>
    %63 = arith.addf %62, %61 : vector<16x1xf32>
    %c0_17 = arith.constant 0 : index
    %c0_18 = arith.constant 0 : index
    %64 = vector.load %arg5[%c0_17, %c0_18] : memref<16x1xf32, #tpu.memory_space<vmem>>, vector<16x1xf32>
    tpu.vector_store %arg5[%c0_17, %c0_18], %63 {strides = array<i32>} : memref<16x1xf32, #tpu.memory_space<vmem>>, vector<16x1xf32>,
    %c0_i32_19 = arith.constant 0 : i32
    %65 = arith.cmpi eq, %arg1, %c0_i32_19 : i32
    %66 = arith.extui %65 : i1 to i32
    %c0_i32_20 = arith.constant 0 : i32
    %67 = arith.cmpi ne, %66, %c0_i32_20 : i32
    scf.if %67 {
      %c0_21 = arith.constant 0 : index
      %c0_22 = arith.constant 0 : index
      %68 = vector.load %arg5[%c0_21, %c0_22] : memref<16x1xf32, #tpu.memory_space<vmem>>, vector<16x1xf32>
      %69 = vector.shape_cast %68 : vector<16x1xf32> to vector<1x16x1xf32>
      %cst_23 = arith.constant dense<0.000000e+00> : vector<1xf32>
      %70 = vector.multi_reduction <add>, %69, %cst_23 [1, 2] : vector<1x16x1xf32> to vector<1xf32>
      %71 = vector.shape_cast %70 : vector<1xf32> to vector<1x1x1xf32>
      %72 = vector.extract %71[0, 0, 0] : f32 from vector<1x1x1xf32>
      %73 = vector.broadcast %72 : f32 to vector<8x128xf32>
      %c0_24 = arith.constant 0 : index
      %c0_25 = arith.constant 0 : index
      %74 = vector.load %arg4[%c0_24, %c0_25] : memref<8x128xf32, #tpu.memory_space<vmem>>, vector<8x128xf32>
      tpu.vector_store %arg4[%c0_24, %c0_25], %73 {strides = array<i32>} : memref<8x128xf32, #tpu.memory_space<vmem>>, vector<8x128xf32>,
    } else {
    }
    return
  }
  func.func @transform_0(%arg0: i32, %arg1: i32) -> (i32, i32) {
    %c1_i32 = arith.constant 1 : i32
    %0 = arith.muli %arg0, %c1_i32 : i32
    %1 = arith.addi %0, %arg1 : i32
    %c0_i32 = arith.constant 0 : i32
    %c0_i32_0 = arith.constant 0 : i32
    return %1, %c0_i32 : i32, i32
  }
  func.func @transform_1(%arg0: i32, %arg1: i32) -> (i32, i32) {
    %c1_i32 = arith.constant 1 : i32
    %0 = arith.muli %arg0, %c1_i32 : i32
    %1 = arith.addi %0, %arg1 : i32
    %c0_i32 = arith.constant 0 : i32
    %c0_i32_0 = arith.constant 0 : i32
    return %1, %c0_i32 : i32, i32
  }
  func.func @transform_2(%arg0: i32, %arg1: i32) -> (i32, i32) {
    %c0_i32 = arith.constant 0 : i32
    %c0_i32_0 = arith.constant 0 : i32
    return %arg0, %c0_i32 : i32, i32
  }
}

</mosaic_0001>

<llo_original>
// kernel: tpu_custom_call.1
$region0: #{tpu_custom_call.1}
  #allocation0 [shape = 'u32[]', space=smem, size = 0x4, offset = 0x4, fixed_abs, tag = 'smem constant byte address 0x4 - core index']
  #allocation1 [shape = 'u32[144,128]{1,0:T(1,128)}', space=vmem, size = 0x12000, scoped, tag = 'internal scratch']
  #allocation2 [shape = 'f32[16,1]{1,0:T(8,128)}', space=vmem, size = 0x2000, scoped, tag = 'scratch operand']
  %s0 = inlined_call_operand.vmem [shape: s32[32,2], index: 0, kind: input, shape index: {}]
  %s1 = inlined_call_operand.vmem [shape: bf16[32,128], index: 1, kind: input, shape index: {}]
  %s2 = inlined_call_operand.hbm [shape: f32[16,128], index: 2, kind: output, shape index: {}]
  %s3 = sld [smem:[#allocation0]]
  $region49: #{tpu_custom_call.1} parent=0
    _
  %s5 = ssub.s32 1, %s3
  %s6 = scalar_select 0, %s5, %s3
  $region1: #{tpu_custom_call.1} parent=0
    #allocation3 [shape = 'u8[8192]{0}', space=vmem, size = 0x2000, scoped, tag = 'output window, operand 0']
    #allocation4 [shape = 's32[2]{0}', space=sflag, size = 0x8, scoped, tag = 'scoped memory for tpu_custom_call.1']
    %7 = vsyncpa [#allocation4], 0
    %s8 = scalar_lea.sflag [#allocation4], 1
    %9 = vsyncpa %s8, 0
    loop: start=0, step=1, limit=4
    $region2: #{tpu_custom_call.1} parent=1 // loop_pre_header
      _
    $region3: #{tpu_custom_call.1} parent=1 // loop_header
      %s11 = sphi 0, %s15
      %p12 = scmp.ge.s32.totalorder %s11, 4
      %s18 = sphi 0, %s30
      %s19 = sphi 0, %s26
      %s20 = sphi 0, %s18
      %s21 = sphi 0, %s19
      %s22 = sphi 0, %s20
      %s23 = sphi 0, %s21
      %s35 = sphi 0, %s37
      %s38 = sphi 0, %s35
      %s39 = sphi 0, %s38
      %s55 = sphi 0, %s39
      %s63 = sphi 0, %s65
      %s66 = sphi 0, %s63
      %s67 = sphi 0, %s66
      %s83 = sphi 0, %s67
      %s89 = sphi 0, %s91
      %s92 = sphi 0, %s89
      %s93 = sphi 0, %s92
      %s109 = sphi 0, %s93
    $region4: #{tpu_custom_call.1} parent=1 // loop_header_branch
      %14 = sbr.rel (%p12) target = $region8
    $region5: #{tpu_custom_call.1} parent=1 // loop_body
      %s16 = ssub.s32 %s11, 1
      %s17 = ssub.s32 %s11, 2
      %s24 = sadd.s32 1, %s19
      %p25 = scmp.ge.s32.totalorder %s24, 1
      %s26 = scalar_select %p25, 0, %s24
      %s27 = sadd.s32 1, %s18
      %s28 = scalar_select %p25, %s27, %s18
      %p29 = scmp.ge.s32.totalorder %s28, 2
      %s30 = scalar_select %p29, 0, %s28
      %s31 = sadd.s32 %s18, %s19
      %s32 = sadd.s32 %s30, %s26
      %s33 = ssub.s32 %s31, %s32
      %p34 = scmp.eq.s32.totalorder %s33, 0
      %s36 = sadd.s32 %s35, 1
      %s37 = scalar_select %p34, %s35, %s36
      %p40 = pneg %p34
      %p41 = scmp.eq.s32.totalorder %s11, 1
      %p42 = por %p40, %p41
      %p43 = scmp.ne.s32.totalorder %s35, %s38
      %p44 = scmp.eq.s32.totalorder %s11, 0
      %p45 = por %p43, %p44
      %p46 = scmp.ne.s32.totalorder %s35, %s38
      %p47 = scmp.eq.s32.totalorder %s16, 1
      %p48 = por %p46, %p47
      %p49 = scmp.ne.s32.totalorder %s38, %s39
      %p50 = scmp.eq.s32.totalorder %s16, 0
      %p51 = por %p49, %p50
      %p52 = scmp.ne.s32.totalorder %s38, %s39
      %p53 = scmp.eq.s32.totalorder %s17, 1
      %p54 = por %p52, %p53
      %p56 = scmp.ne.s32.totalorder %s39, %s55
      %p57 = scmp.eq.s32.totalorder %s17, 0
      %p58 = por %p56, %p57
      %s59 = sadd.s32 %s18, %s19
      %s60 = sadd.s32 %s30, %s26
      %s61 = ssub.s32 %s59, %s60
      %p62 = scmp.eq.s32.totalorder %s61, 0
      %s64 = sadd.s32 %s63, 1
      %s65 = scalar_select %p62, %s63, %s64
      %p68 = pneg %p62
      %p69 = scmp.eq.s32.totalorder %s11, 1
      %p70 = por %p68, %p69
      %p71 = scmp.ne.s32.totalorder %s63, %s66
      %p72 = scmp.eq.s32.totalorder %s11, 0
      %p73 = por %p71, %p72
      %p74 = scmp.ne.s32.totalorder %s63, %s66
      %p75 = scmp.eq.s32.totalorder %s16, 1
      %p76 = por %p74, %p75
      %p77 = scmp.ne.s32.totalorder %s66, %s67
      %p78 = scmp.eq.s32.totalorder %s16, 0
      %p79 = por %p77, %p78
      %p80 = scmp.ne.s32.totalorder %s66, %s67
      %p81 = scmp.eq.s32.totalorder %s17, 1
      %p82 = por %p80, %p81
      %p84 = scmp.ne.s32.totalorder %s67, %s83
      %p85 = scmp.eq.s32.totalorder %s17, 0
      %p86 = por %p84, %p85
      %s87 = ssub.s32 %s18, %s30
      %p88 = scmp.eq.s32.totalorder %s87, 0
      %s90 = sadd.s32 %s89, 1
      %s91 = scalar_select %p88, %s89, %s90
      %p94 = pneg %p88
      %p95 = scmp.eq.s32.totalorder %s11, 1
      %p96 = por %p94, %p95
      %p97 = scmp.ne.s32.totalorder %s89, %s92
      %p98 = scmp.eq.s32.totalorder %s11, 0
      %p99 = por %p97, %p98
      %p100 = scmp.ne.s32.totalorder %s89, %s92
      %p101 = scmp.eq.s32.totalorder %s16, 1
      %p102 = por %p100, %p101
      %p103 = scmp.ne.s32.totalorder %s92, %s93
      %p104 = scmp.eq.s32.totalorder %s16, 0
      %p105 = por %p103, %p104
      %p106 = scmp.ne.s32.totalorder %s92, %s93
      %p107 = scmp.eq.s32.totalorder %s17, 1
      %p108 = por %p106, %p107
      %p110 = scmp.ne.s32.totalorder %s93, %s109
      %p111 = scmp.eq.s32.totalorder %s17, 0
      %p112 = por %p110, %p111
      %p113 = scmp.le.s32.totalorder 1, %s11
      %p114 = scmp.lt.s32.totalorder %s11, 3
      %p115 = pnand %p113, %p114
      %p116 = pneg %p115
      // Predicated region
      $region9: #{tpu_custom_call.1} parent=5 // pred_check
        _
      $region10: #{tpu_custom_call.1} parent=5 // pred_check_branch
        %118 = sbr.rel (%p115) target = $region12
      $region11: #{tpu_custom_call.1} parent=5 // pred_region
        %s119 = ssub.s32 %s11, 1
      $region12: #{tpu_custom_call.1} parent=5 // pred_fallthru
        _
      %p120 = scmp.lt.s32.totalorder %s11, 2
      // Predicated region
      $region13: #{tpu_custom_call.1} parent=5 // pred_check
        %p121 = pneg %p120
      $region14: #{tpu_custom_call.1} parent=5 // pred_check_branch
        %123 = sbr.rel (%p121) target = $region16
      $region15: #{tpu_custom_call.1} parent=5 // pred_region
        // Predicated region
        $region17: #{tpu_custom_call.1} parent=15 // pred_check
          %p124 = pneg %p45
        $region18: #{tpu_custom_call.1} parent=15 // pred_check_branch
          %126 = sbr.rel (%p124) target = $region20
        $region19: #{tpu_custom_call.1} parent=15 // pred_region
          %s127 = sadd.s32 %s18, %s19
          %s128 = smul.u32 2, %s127
          %p129 = scmp.lt.s32.totalorder %s128, 3
          %s130 = scalar_select %p129, %s128, 3
          %s131 = smul.addr %s130, 8
          %s132 = scalar_lea.vmem %s0, %s131
          %s133 = sadd.s32 %s18, %s19
          %s134 = smul.u32 2, %s133
        $region20: #{tpu_custom_call.1} parent=15 // pred_fallthru
          _
        // Predicated region
        $region21: #{tpu_custom_call.1} parent=15 // pred_check
          %p135 = pneg %p73
        $region22: #{tpu_custom_call.1} parent=15 // pred_check_branch
          %137 = sbr.rel (%p135) target = $region24
        $region23: #{tpu_custom_call.1} parent=15 // pred_region
          %s138 = sadd.s32 %s18, %s19
          %s139 = smul.u32 2, %s138
          %p140 = scmp.lt.s32.totalorder %s139, 3
          %s141 = scalar_select %p140, %s139, 3
          %s142 = smul.addr %s141, 4
          %s143 = scalar_lea.vmem %s1, %s142
          %s144 = sadd.s32 %s18, %s19
          %s145 = smul.u32 2, %s144
        $region24: #{tpu_custom_call.1} parent=15 // pred_fallthru
          _
      $region16: #{tpu_custom_call.1} parent=5 // pred_fallthru
        _
      %p146 = scmp.le.s32.totalorder 1, %s11
      %p147 = scmp.lt.s32.totalorder %s11, 3
      %p148 = pnand %p146, %p147
      %p149 = pneg %p148
      // Predicated region
      $region25: #{tpu_custom_call.1} parent=5 // pred_check
        _
      $region26: #{tpu_custom_call.1} parent=5 // pred_check_branch
        %151 = sbr.rel (%p148) target = $region28
      $region27: #{tpu_custom_call.1} parent=5 // pred_region
        %s152 = ssub.s32 %s11, 1
        %s153 = sadd.s32 %s20, %s21
        %s154 = smul.u32 2, %s153
        %p155 = scmp.lt.s32.totalorder %s154, 3
        %s156 = scalar_select %p155, %s154, 3
        %s157 = smul.addr %s156, 8
        %s158 = scalar_lea.vmem %s0, %s157
        %p159 = pneg %p51
        %p160 = pneg %p48
        %s161 = sadd.s32 %s20, %s21
        %s162 = smul.u32 2, %s161
        %p163 = scmp.lt.s32.totalorder %s162, 3
        %s164 = scalar_select %p163, %s162, 3
        %s165 = smul.addr %s164, 4
        %s166 = scalar_lea.vmem %s1, %s165
        %p167 = pneg %p79
        %p168 = pneg %p76
        %p169 = pneg %p105
        %p170 = pneg %p102
        %s171 = sand.u32 %s92, 1
        %s172 = scalar_lea.sflag [#allocation4], %s171
        %s173 = sand.u32 %s92, 1
        %s174 = smul.addr %s173, 8
        %s175 = scalar_lea.vmem [#allocation3], %s174
        %s176 = sadd.s32 %s20, %s21
        %s177 = smul.u32 2, %s176
        %p178 = scmp.lt.s32.totalorder %s177, 3
        %s179 = scalar_select %p178, %s177, 3
        %s180 = smul.addr %s179, 8
        %s181 = scalar_lea.vmem %s0, %s180
        %s182 = sadd.s32 %s20, %s21
        %s183 = smul.u32 2, %s182
        %s184 = sadd.s32 %s20, %s21
        %s185 = smul.u32 2, %s184
        %p186 = scmp.lt.s32.totalorder %s185, 3
        %s187 = scalar_select %p186, %s185, 3
        %s188 = smul.addr %s187, 4
        %s189 = scalar_lea.vmem %s1, %s188
        %s190 = sadd.s32 %s20, %s21
        %s191 = smul.u32 2, %s190
        %p192 = scmp.eq.s32.totalorder %s21, 0
        // Predicated region
        $region29: #{tpu_custom_call.1} parent=27 // pred_check
          %p193 = pneg %p192
        $region30: #{tpu_custom_call.1} parent=27 // pred_check_branch
          %195 = sbr.rel (%p193) target = $region32
        $region31: #{tpu_custom_call.1} parent=27 // pred_region
          %vm196 = vcmask 7168
          %197 = vst.msk [vmem:[#allocation2] sm:$0xff] %vm196, 0.0
          %198 = vst.msk [vmem:[#allocation2 + $0x8] sm:$0xff] %vm196, 0.0
        $region32: #{tpu_custom_call.1} parent=27 // pred_fallthru
          _
        %v199 = vld [vmem:[%s189] sm:$0xf]
        %v200 = vld [vmem:[%s189 + $0x4] sm:$0xf]
        %v201 = vunpack.c.l.bf16 %v199
        %v202 = vunpack.c.l.bf16 %v200
        %v203 = vld [vmem:[%s181] sm:$0xff]
        %v204 = vld [vmem:[%s181 + $0x8] sm:$0xff]
        %205 = vmax.xlane.f32.xlu0 %v201
        %v206 = vpop.xlane.xlu0 %205
        %207 = vmax.xlane.f32.xlu0 %v202
        %v208 = vpop.xlane.xlu0 %207
        %v209 = vsub.f32 %v201, %v206
        %v210 = vsub.f32 %v202, %v208
        %v211 = vmul.f32 %v209, 1.442695
        %v212 = vpow.pop %v211
        %v213 = vmul.f32 %v210, 1.442695
        %v214 = vpow.pop %v213
        %215 = vadd.xlane.f32.xlu0 %v212
        %v216 = vpop.xlane.xlu0 %215
        %217 = vadd.xlane.f32.xlu0 %v214
        %v218 = vpop.xlane.xlu0 %217
        %v219 = vlog2.pop %v216
        %v220 = vmul.f32 %v219, 0.6931472
        %v221 = vlog2.pop %v218
        %v222 = vmul.f32 %v221, 0.6931472
        %v223 = vadd.f32 %v206, %v220
        %v224 = vadd.f32 %v208, %v222
        %v225 = vlaneseq
        %v226 = vand.u32 %v225, 127
        %227 = vset.pattern.permute.xlu0 0
        %228 = vperm.xlu0 %227, %v203
        %v229 = vpop.permute.xlu0 %228
        %230 = vset.pattern.permute.xlu0 0
        %231 = vperm.xlu0 %230, %v204
        %v232 = vpop.permute.xlu0 %231
        %vm233 = vcmp.eq.s32.totalorder %v226, %v229
        %vm234 = vcmp.eq.s32.totalorder %v226, %v232
        %v235 = vsel %vm233, %v201, 0.0
        %v236 = vsel %vm234, %v202, 0.0
        %237 = vadd.xlane.f32.xlu0 %v235
        %v238 = vpop.xlane.xlu0 %237
        %239 = vadd.xlane.f32.xlu0 %v236
        %v240 = vpop.xlane.xlu0 %239
        %vm241 = vcmp.ne.s32.totalorder %v203, 0
        %vm242 = vcmp.ne.s32.totalorder %v204, 0
        %v243 = vsub.f32 %v223, %v238
        %v244 = vsub.f32 %v224, %v240
        %v245 = vsel %vm241, %v243, 0.0
        %v246 = vsel %vm242, %v244, 0.0
        %vm247 = vcmp.eq.s32.totalorder %v203, 120
        %vm248 = vcmp.eq.s32.totalorder %v204, 120
        %v249 = vsel %vm247, 1, 0
        %v250 = vsel %vm248, 1, 0
        %v251 = vcvt.s32.f32 %v249
        %v252 = vcvt.s32.f32 %v250
        %v253 = vmul.f32 %v251, 2.0
        %v254 = vmul.f32 %v252, 2.0
        %v255 = vadd.f32 %v253, 0.0
        %v256 = vadd.f32 %v254, 0.0
        %vm257 = vcmp.eq.s32.totalorder %v203, 121
        %vm258 = vcmp.eq.s32.totalorder %v204, 121
        %v259 = vsel %vm257, 1, 0
        %v260 = vsel %vm258, 1, 0
        %v261 = vcvt.s32.f32 %v259
        %v262 = vcvt.s32.f32 %v260
        %v263 = vmul.f32 %v261, 2.0
        %v264 = vmul.f32 %v262, 2.0
        %v265 = vadd.f32 %v255, %v263
        %v266 = vadd.f32 %v256, %v264
        %vm267 = vcmp.eq.s32.totalorder %v203, 122
        %vm268 = vcmp.eq.s32.totalorder %v204, 122
        %v269 = vsel %vm267, 1, 0
        %v270 = vsel %vm268, 1, 0
        %v271 = vcvt.s32.f32 %v269
        %v272 = vcvt.s32.f32 %v270
        %v273 = vmul.f32 %v271, 2.0
        %v274 = vmul.f32 %v272, 2.0
        %v275 = vadd.f32 %v265, %v273
        %v276 = vadd.f32 %v266, %v274
        %279 = vrot.lane.b32.xlu0 %v275, 127
        %v280 = vpop.permute.xlu0 %279
        %281 = vrot.lane.b32.xlu0 %v276, 127
        %v282 = vpop.permute.xlu0 %281
        %v285 = vadd.f32 %v245, %v280
        %v286 = vadd.f32 %v246, %v282
        %s287 = sadd.s32 %s20, %s21
        %s288 = smul.u32 %s287, 16
        %v289 = vlaneseq
        %v290 = vshrl.u32 %v289, 7
        %v291 = vadd.s32 %v290, 8
        %v292 = vstv %s288
        %v293 = vadd.s32 %v292, %v290
        %v294 = vadd.s32 %v292, %v291
        %vm295 = vcmp.lt.s32.totalorder %v293, 16
        %vm296 = vcmp.lt.s32.totalorder %v294, 16
        %v297 = vsel %vm295, %v285, 0.0
        %v298 = vsel %vm296, %v286, 0.0
        %v299 = vld [vmem:[#allocation2] sm:$0xff]
        %v300 = vld [vmem:[#allocation2 + $0x8] sm:$0xff]
        %v301 = vadd.f32 %v299, %v297
        %v302 = vadd.f32 %v300, %v298
        %vm303 = vcmask 7168
        %304 = vst.msk [vmem:[#allocation2] sm:$0xff] %vm303, %v301
        %305 = vst.msk [vmem:[#allocation2 + $0x8] sm:$0xff] %vm303, %v302
        // Predicated region
        $region33: #{tpu_custom_call.1} parent=27 // pred_check
          %p306 = pneg %p192
        $region34: #{tpu_custom_call.1} parent=27 // pred_check_branch
          %308 = sbr.rel (%p306) target = $region36
        $region35: #{tpu_custom_call.1} parent=27 // pred_region
          %v309 = vld [vmem:[#allocation2] sm:$0xff]
          %v310 = vld [vmem:[#allocation2 + $0x8] sm:$0xff]
          %v311 = vsel %vm303, %v309, 0.0
          %v312 = vsel %vm303, %v310, 0.0
          %v313 = vadd.f32 %v311, %v312
          %314 = vadd.xlane.f32.xlu0 %v313
          %v315 = vpop.xlane.xlu0 %314
          %v316 = vrot.slane %v315, 4
          %v317 = vadd.f32 %v315, %v316
          %v318 = vrot.slane %v317, 2
          %v319 = vadd.f32 %v317, %v318
          %v320 = vrot.slane %v319, 1
          %v321 = vadd.f32 %v319, %v320
          %s322 = vtos %v321
          %v323 = vstv %s322
          %324 = vst [vmem:[%s175] sm:$0xff] %v323
        $region36: #{tpu_custom_call.1} parent=27 // pred_fallthru
          _
        %s325 = sand.u32 %s92, 1
        %s326 = scalar_lea.sflag [#allocation4], %s325
        %s327 = sand.u32 %s92, 1
        %s328 = smul.addr %s327, 8
        %s329 = scalar_lea.vmem [#allocation3], %s328
        // Predicated region
        $region37: #{tpu_custom_call.1} parent=27 // pred_check
          %p330 = pneg %p102
        $region38: #{tpu_custom_call.1} parent=27 // pred_check_branch
          %332 = sbr.rel (%p330) target = $region40
        $region39: #{tpu_custom_call.1} parent=27 // pred_region
          %s334 = ssub.s32 128, 128
          %335 = vsyncadd %s326, %s334
          %s336 = smul.addr %s20, 128
          %s337 = scalar_lea.hbm %s2, %s336
          %s339 = sshll.u32 %s329, 4
          %s340 = int_to_ptr.vmem [resolvable:$true] %s339
          %342 = dma.vmem_to_hbm [thread:$0]  %s340, 128, %s337, %s326
        $region40: #{tpu_custom_call.1} parent=27 // pred_fallthru
          _
      $region28: #{tpu_custom_call.1} parent=5 // pred_fallthru
        _
      %p343 = scmp.le.s32.totalorder 2, %s11
      // Predicated region
      $region41: #{tpu_custom_call.1} parent=5 // pred_check
        %p344 = pneg %p343
      $region42: #{tpu_custom_call.1} parent=5 // pred_check_branch
        %346 = sbr.rel (%p344) target = $region44
      $region43: #{tpu_custom_call.1} parent=5 // pred_region
        %s347 = ssub.s32 %s11, 2
        // Predicated region
        $region45: #{tpu_custom_call.1} parent=43 // pred_check
          %p348 = pneg %p108
        $region46: #{tpu_custom_call.1} parent=43 // pred_check_branch
          %350 = sbr.rel (%p348) target = $region48
        $region47: #{tpu_custom_call.1} parent=43 // pred_region
          %s351 = sand.u32 %s93, 1
          %s352 = scalar_lea.sflag [#allocation4], %s351
          %s353 = sand.u32 %s93, 1
          %s354 = smul.addr %s353, 8
          %s355 = scalar_lea.vmem [#allocation3], %s354
          %356 = dma.done %s352, 128
        $region48: #{tpu_custom_call.1} parent=43 // pred_fallthru
          _
      $region44: #{tpu_custom_call.1} parent=5 // pred_fallthru
        _
    $region6: #{tpu_custom_call.1} parent=1 // loop_footer
      %s15 = sadd.s32 1, %s11
    $region7: #{tpu_custom_call.1} parent=1 // loop_footer_branch
      %10 = sbr.rel target = $region3
    $region8: #{tpu_custom_call.1} parent=1 // loop_exit
      _
    %357 = vsyncpa [#allocation4], 1
    %s358 = scalar_lea.sflag [#allocation4], 1
    %359 = vsyncpa %s358, 1

</llo_original>
